<compile_context>
chip_gen: v7x
topology: tpu7x:2x2x1
jax: 0.10.0
libtpu: 0.0.40
codegen_flags: <defaults>
</compile_context>

<pallas_src>
import jax
import jax.numpy as jnp
import numpy as np
from jax.experimental import pallas as pl
from jax.experimental.pallas import tpu as pltpu

LANES = 128
MAX_ROW_TILE = 2048   # 2048 x 128 f32 = 1 MiB per input per pipeline buffer


def _make_kernel(n_valid: int, row_tile: int):
    """Kernel over one (row_tile, 128) slab; emits per-lane TP / PP partials."""

    def kernel(preds_ref, targets_ref, tp_ref, pp_ref):
        i = pl.program_id(0)
        shape = preds_ref.shape                                    # (row_tile, 128)
        row = jax.lax.broadcasted_iota(jnp.int32, shape, 0)
        lane = jax.lax.broadcasted_iota(jnp.int32, shape, 1)
        idx = (i * row_tile + row) * LANES + lane
        valid = idx < n_valid                                      # masks pad + ragged tail

        # sigmoid(x) >= 0.5  <=>  x >= 0   (no EUP transcendental)
        pred_pos = (preds_ref[...] >= 0) & valid
        true_pos = targets_ref[...] >= 0.5

        tp = (pred_pos & true_pos).astype(jnp.float32)
        pp = pred_pos.astype(jnp.float32)

        # mostly vreg-wise VALU adds + one sublane reduce; lane-dense (1,128) store
        tp_ref[...] = jnp.sum(tp, axis=0, keepdims=True)
        pp_ref[...] = jnp.sum(pp, axis=0, keepdims=True)

    return kernel


@jax.jit
def precision_forward(preds, targets, tp_state, fp_state):
    """Returns (precision, new_tp_state, new_fp_state) for one batch."""
    y = preds.reshape(-1)                      # keep native dtype (f32/bf16 both fine)
    t = targets.reshape(-1)
    n = y.shape[0]

    pad = (-n) % LANES
    if pad:
        # TODO(synk): pad copy only when the sample count isn't lane-aligned;
        # padded slots are excluded by the in-kernel index mask, values don't matter.
        y = jnp.pad(y, (0, pad))
        t = jnp.pad(t, (0, pad))
    rows = (n + pad) // LANES

    if rows <= MAX_ROW_TILE:
        row_tile = rows                        # single block == full array dims
        grid = 1
    else:
        row_tile = MAX_ROW_TILE
        grid = pl.cdiv(rows, row_tile)         # ragged last block masked in-kernel

    y2 = y.reshape(rows, LANES)                # metadata reshape (contiguous, no copy)
    t2 = t.reshape(rows, LANES)

    tp_part, pp_part = pl.pallas_call(
        _make_kernel(n, row_tile),
        out_shape=(
            jax.ShapeDtypeStruct((grid, LANES), jnp.float32),
            jax.ShapeDtypeStruct((grid, LANES), jnp.float32),
        ),
        grid_spec=pltpu.PrefetchScalarGridSpec(
            num_scalar_prefetch=0,
            grid=(grid,),
            in_specs=[
                pl.BlockSpec((row_tile, LANES), lambda r: (r, 0)),
                pl.BlockSpec((row_tile, LANES), lambda r: (r, 0)),
            ],
            out_specs=(
                pl.BlockSpec((1, LANES), lambda r: (r, 0)),
                pl.BlockSpec((1, LANES), lambda r: (r, 0)),
            ),
        ),
        compiler_params=pltpu.CompilerParams(
            # independent per-block partials -> shardable across v7x's 2 TCs
            dimension_semantics=("parallel",),
        ),
    )(y2, t2)

    # Final reduce in int32 for exact counts (lane partials are exact in f32).
    tpi = jnp.sum(tp_part.astype(jnp.int32))
    ppi = jnp.sum(pp_part.astype(jnp.int32))
    fpi = ppi - tpi

    # torch.true_divide(tpi, tpi + fpi) ; NaN when no predicted positives (as torch).
    precision = tpi.astype(jnp.float32) / ppi.astype(jnp.float32)

    # TODO(synk): nn.Parameter in-place state update has no Pallas equivalent;
    # new counter values are returned functionally instead.
    return precision, tp_state + tpi, fp_state + fpi


def _numpy_reference(preds, targets):
    p = np.asarray(preds, np.float32).reshape(-1).astype(np.float64)
    t = np.asarray(targets, np.float32).reshape(-1)
    y_pred = 1.0 / (1.0 + np.exp(-p))
    pred_pos = y_pred >= 0.5
    tpi = int(np.sum(pred_pos & (t >= 0.5)))
    fpi = int(np.sum(pred_pos & (t < 0.5)))
    prec = tpi / (tpi + fpi) if (tpi + fpi) > 0 else float("nan")
    return tpi, fpi, prec


if __name__ == "__main__":
    key = jax.random.PRNGKey(0)
    k1, k2, k3, k4 = jax.random.split(key, 4)

    # --- small case: batch=2, seq=64 -> 128 samples (single lane-row) ---
    preds = jax.random.normal(k1, (2, 64), dtype=jnp.float32) * 2.0
    targets = (jax.random.uniform(k2, (2, 64)) > 0.5).astype(jnp.float32)

    tp0 = jnp.zeros((), jnp.int32)
    fp0 = jnp.zeros((), jnp.int32)

    prec, tp_new, fp_new = precision_forward(preds, targets, tp0, fp0)
    jax.block_until_ready((prec, tp_new, fp_new))

    tpi_r, fpi_r, prec_r = _numpy_reference(preds, targets)
    assert int(tp_new) == tpi_r, (int(tp_new), tpi_r)
    assert int(fp_new) == fpi_r, (int(fp_new), fpi_r)
    assert abs(float(prec) - prec_r) < 1e-6

    # --- larger case exercising the non-lane-aligned (masked) path ---
    preds_big = jax.random.normal(k3, (3, 50000), dtype=jnp.float32)
    targets_big = (jax.random.uniform(k4, (3, 50000)) > 0.5).astype(jnp.float32)

    prec2, tp2, fp2 = precision_forward(preds_big, targets_big, tp_new, fp_new)
    jax.block_until_ready((prec2, tp2, fp2))

    tpi_r2, fpi_r2, prec_r2 = _numpy_reference(preds_big, targets_big)
    assert int(tp2) == tpi_r + tpi_r2, (int(tp2), tpi_r + tpi_r2)   # stateful accumulation
    assert int(fp2) == fpi_r + fpi_r2, (int(fp2), fpi_r + fpi_r2)
    assert abs(float(prec2) - prec_r2) < 1e-6

    print("KERNEL_OK")
</pallas_src>

<mosaic_0001>
module attributes {stable_mosaic.version = 11 : i64} {
  func.func @kernel(%arg0: i32, %arg1: memref<1x128xf32, #tpu.memory_space<vmem>>, %arg2: memref<1x128xf32, #tpu.memory_space<vmem>>, %arg3: memref<1x128xf32, #tpu.memory_space<vmem>>, %arg4: memref<1x128xf32, #tpu.memory_space<vmem>>) attributes {dimension_semantics = [#tpu.dimension_semantics<parallel>], iteration_bounds = array<i64: 1>, scalar_prefetch = 0 : i64, scratch_operands = 0 : i64, tpu.core_type = #tpu.core_type<tc>, window_params = [{transform_indices = @transform_0, window_bounds = array<i64: 1, 128>}, {transform_indices = @transform_1, window_bounds = array<i64: 1, 128>}, {transform_indices = @transform_2, window_bounds = array<i64: 1, 128>}, {transform_indices = @transform_3, window_bounds = array<i64: 1, 128>}]} {
    %0 = tpu.iota {dimensions = array<i32: 0>} : vector<1x128xi32>
    %1 = tpu.iota {dimensions = array<i32: 1>} : vector<1x128xi32>
    %c1_i32 = arith.constant 1 : i32
    %2 = arith.muli %arg0, %c1_i32 : i32
    %3 = vector.broadcast %2 : i32 to vector<1x128xi32>
    %4 = arith.addi %3, %0 : vector<1x128xi32>
    %c128_i32 = arith.constant 128 : i32
    %5 = vector.broadcast %c128_i32 : i32 to vector<1x128xi32>
    %6 = arith.muli %4, %5 : vector<1x128xi32>
    %7 = arith.addi %6, %1 : vector<1x128xi32>
    %c128_i32_0 = arith.constant 128 : i32
    %8 = vector.broadcast %c128_i32_0 : i32 to vector<1x128xi32>
    %9 = arith.cmpi slt, %7, %8 : vector<1x128xi32>
    %c0 = arith.constant 0 : index
    %c0_1 = arith.constant 0 : index
    %10 = vector.load %arg1[%c0, %c0_1] : memref<1x128xf32, #tpu.memory_space<vmem>>, vector<1x128xf32>
    %cst = arith.constant 0.000000e+00 : f32
    %11 = vector.broadcast %cst : f32 to vector<1x128xf32>
    %12 = arith.cmpf oge, %10, %11 : vector<1x128xf32>
    %13 = arith.andi %12, %9 : vector<1x128xi1>
    %c0_2 = arith.constant 0 : index
    %c0_3 = arith.constant 0 : index
    %14 = vector.load %arg2[%c0_2, %c0_3] : memref<1x128xf32, #tpu.memory_space<vmem>>, vector<1x128xf32>
    %cst_4 = arith.constant 5.000000e-01 : f32
    %15 = vector.broadcast %cst_4 : f32 to vector<1x128xf32>
    %16 = arith.cmpf oge, %14, %15 : vector<1x128xf32>
    %17 = arith.andi %13, %16 : vector<1x128xi1>
    %18 = arith.extui %17 : vector<1x128xi1> to vector<1x128xi32>
    %19 = arith.sitofp %18 : vector<1x128xi32> to vector<1x128xf32>
    %20 = arith.extui %13 : vector<1x128xi1> to vector<1x128xi32>
    %21 = arith.sitofp %20 : vector<1x128xi32> to vector<1x128xf32>
    %cst_5 = arith.constant dense<0.000000e+00> : vector<128xf32>
    %22 = vector.multi_reduction <add>, %19, %cst_5 [0] : vector<1x128xf32> to vector<128xf32>
    %23 = vector.shape_cast %22 : vector<128xf32> to vector<1x128xf32>
    %c0_6 = arith.constant 0 : index
    %c0_7 = arith.constant 0 : index
    %24 = vector.load %arg3[%c0_6, %c0_7] : memref<1x128xf32, #tpu.memory_space<vmem>>, vector<1x128xf32>
    tpu.vector_store %arg3[%c0_6, %c0_7], %23 {strides = array<i32>} : memref<1x128xf32, #tpu.memory_space<vmem>>, vector<1x128xf32>,
    %cst_8 = arith.constant dense<0.000000e+00> : vector<128xf32>
    %25 = vector.multi_reduction <add>, %21, %cst_8 [0] : vector<1x128xf32> to vector<128xf32>
    %26 = vector.shape_cast %25 : vector<128xf32> to vector<1x128xf32>
    %c0_9 = arith.constant 0 : index
    %c0_10 = arith.constant 0 : index
    %27 = vector.load %arg4[%c0_9, %c0_10] : memref<1x128xf32, #tpu.memory_space<vmem>>, vector<1x128xf32>
    tpu.vector_store %arg4[%c0_9, %c0_10], %26 {strides = array<i32>} : memref<1x128xf32, #tpu.memory_space<vmem>>, vector<1x128xf32>,
    return
  }
  func.func @transform_0(%arg0: i32) -> (i32, i32) {
    %c0_i32 = arith.constant 0 : i32
    %c0_i32_0 = arith.constant 0 : i32
    return %arg0, %c0_i32 : i32, i32
  }
  func.func @transform_1(%arg0: i32) -> (i32, i32) {
    %c0_i32 = arith.constant 0 : i32
    %c0_i32_0 = arith.constant 0 : i32
    return %arg0, %c0_i32 : i32, i32
  }
  func.func @transform_2(%arg0: i32) -> (i32, i32) {
    %c0_i32 = arith.constant 0 : i32
    %c0_i32_0 = arith.constant 0 : i32
    return %arg0, %c0_i32 : i32, i32
  }
  func.func @transform_3(%arg0: i32) -> (i32, i32) {
    %c0_i32 = arith.constant 0 : i32
    %c0_i32_0 = arith.constant 0 : i32
    return %arg0, %c0_i32 : i32, i32
  }
}

</mosaic_0001>

<llo_original>
// kernel: precision_forward.1
$region0: #{precision_forward.1}
  #allocation0 [shape = 'u32[]', space=smem, size = 0x4, offset = 0x4, fixed_abs, tag = 'smem constant byte address 0x4 - core index']
  #allocation1 [shape = 'u32[144,128]{1,0:T(1,128)}', space=vmem, size = 0x12000, scoped, tag = 'internal scratch']
  %s0 = inlined_call_operand.vmem [shape: f32[1,128], index: 0, kind: input, shape index: {}]
  %s1 = inlined_call_operand.vmem [shape: f32[1,128], index: 1, kind: input, shape index: {}]
  %s2 = inlined_call_operand.vmem [shape: f32[1,128], index: 2, kind: output, shape index: {0}]
  %s3 = inlined_call_operand.vmem [shape: f32[1,128], index: 3, kind: output, shape index: {1}]
  %4 = xla_tuple %s2, %s3
  %s5 = sld [smem:[#allocation0]]
  $region26: #{precision_forward.1} parent=0
    _
  %s7 = ssub.s32 1, %s5
  %s8 = scalar_select 0, %s7, %s5
  // Predicated region
  $region2: #{precision_forward.1} parent=0 // pred_check
    _
  $region3: #{precision_forward.1} parent=0 // pred_check_branch
    %10 = sbr.rel (0) target = $region5
  $region4: #{precision_forward.1} parent=0 // pred_region
    _
  $region5: #{precision_forward.1} parent=0 // pred_fallthru
    _
  // Predicated region
  $region6: #{precision_forward.1} parent=0 // pred_check
    _
  $region7: #{precision_forward.1} parent=0 // pred_check_branch
    %12 = sbr.rel (0) target = $region9
  $region8: #{precision_forward.1} parent=0 // pred_region
    _
  $region9: #{precision_forward.1} parent=0 // pred_fallthru
    _
  %v13 = vlaneseq
  %v14 = vshrl.u32 %v13, 7
  %v15 = vlaneseq
  %v16 = vand.u32 %v15, 127
  %v17 = vstv 0
  %v18 = vadd.s32 %v17, %v14
  %v19 = vmul.u32 %v18, 128
  %v20 = vadd.s32 %v19, %v16
  %vm21 = vcmp.lt.s32.totalorder %v20, 128
  %v22 = vld [vmem:[%s0] sm:$0x1]
  %vm23 = vcmp.ge.f32.partialorder %v22, 0.0
  %vm24 = vmand %vm23, %vm21
  %v25 = vld [vmem:[%s1] sm:$0x1]
  %vm26 = vcmp.ge.f32.partialorder %v25, 0.5
  %vm27 = vmand %vm24, %vm26
  %v28 = vsel %vm27, 1, 0
  %v29 = vcvt.s32.f32 %v28
  %v30 = vsel %vm24, 1, 0
  %v31 = vcvt.s32.f32 %v30
  %v32 = vadd.f32 %v29, 0.0
  %33 = vst [vmem:[%s2] sm:$0x1] %v32
  %v34 = vadd.f32 %v31, 0.0
  %35 = vst [vmem:[%s3] sm:$0x1] %v34
  // Predicated region
  $region10: #{precision_forward.1} parent=0 // pred_check
    _
  $region11: #{precision_forward.1} parent=0 // pred_check_branch
    %37 = sbr.rel (0) target = $region13
  $region12: #{precision_forward.1} parent=0 // pred_region
    _
  $region13: #{precision_forward.1} parent=0 // pred_fallthru
    _
  // Predicated region
  $region14: #{precision_forward.1} parent=0 // pred_check
    _
  $region15: #{precision_forward.1} parent=0 // pred_check_branch
    %39 = sbr.rel (0) target = $region17
  $region16: #{precision_forward.1} parent=0 // pred_region
    _
  $region17: #{precision_forward.1} parent=0 // pred_fallthru
    _
  // Predicated region
  $region18: #{precision_forward.1} parent=0 // pred_check
    _
  $region19: #{precision_forward.1} parent=0 // pred_check_branch
    %41 = sbr.rel (0) target = $region21
  $region20: #{precision_forward.1} parent=0 // pred_region
    _
  $region21: #{precision_forward.1} parent=0 // pred_fallthru
    _
  // Predicated region
  $region22: #{precision_forward.1} parent=0 // pred_check
    _
  $region23: #{precision_forward.1} parent=0 // pred_check_branch
    %43 = sbr.rel (0) target = $region25
  $region24: #{precision_forward.1} parent=0 // pred_region
    _
  $region25: #{precision_forward.1} parent=0 // pred_fallthru
    _

</llo_original>
